<compile_context>
chip_gen: v5e
topology: v5e:2x2
jax: 0.10.0
libtpu: 0.0.40
codegen_flags: <defaults>
</compile_context>

<pallas_src>
import jax
import jax.numpy as jnp
from jax.experimental import pallas as pl
from jax.experimental.pallas import tpu as pltpu


def _round_up(n, m):
    return ((n + m - 1) // m) * m


def fraud_convnet_kernel(x_ref, wbig_ref, b1_ref, wf1_ref, bf1_ref,
                         wf2_ref, bf2_ref, out_ref):
    """Fused forward pass for one batch tile.

    x_ref   : (TB, C*L)   input tile, column index = c*L + t (free reshape of NCL)
    wbig_ref: (C*L, L*F)  block-Toeplitz conv weight (causal zeros baked in)
    b1_ref  : (1, F)      conv1 bias
    wf1_ref : (H, F)      fc1 weight (torch layout, used transposed-domain)
    bf1_ref : (H, 1)      fc1 bias
    wf2_ref : (H, 1)      fc2 weight
    bf2_ref : (1, 1)      fc2 bias
    out_ref : (1, 1, TB)  lane-dense sigmoid output row for this tile
    """
    F = b1_ref.shape[1]
    L = wbig_ref.shape[1] // F

    # Causal Conv1d for the whole tile as a single MXU matmul:
    #   conv[b, l*F + f] = sum_{c,t} x[b, c*L + t] * W_big[c*L + t, l*F + f]
    conv = jnp.dot(x_ref[...], wbig_ref[...],
                   preferred_element_type=jnp.float32)          # (TB, L*F)

    # MaxPool1d(L): L-1 full-width VPU maxes over the lane-packed (l, f) slices.
    rep = conv[:, 0:F]
    for l in range(1, L):
        rep = jnp.maximum(rep, conv[:, l * F:(l + 1) * F])
    # Conv bias is constant over l, so it commutes with the max; add it once.
    rep = rep + b1_ref[...]                                     # (TB, F)

    # Transposed FC tail: keeps H on the second-minor axis and the batch on
    # lanes, so fc2 is a cheap sublane reduce and the output store is lane-dense.
    rep_t = rep.T                                               # (F, TB)
    hidden = jnp.dot(wf1_ref[...], rep_t,
                     preferred_element_type=jnp.float32) + bf1_ref[...]  # (H, TB)
    hidden = jnp.maximum(hidden, 0.0)

    # fc2 (output width 1): elementwise mul + sublane reduce (MXU would be wasted).
    logit = jnp.sum(hidden * wf2_ref[...], axis=0, keepdims=True) + bf2_ref[...]  # (1, TB)

    # Sigmoid via tanh identity: lands on the EUP, no f32 divide on the VALU.
    out_ref[0] = 0.5 * (jnp.tanh(0.5 * logit) + 1.0)


def fraud_convnet_forward(x_ncl, packed_params, batch_tile=2048):
    """x_ncl: (B, C, L) float32 (PyTorch NCL layout, only a free reshape applied)."""
    w_big, b1, wf1, bf1, wf2, bf2 = packed_params
    B, C, L = x_ncl.shape
    CL, LF = w_big.shape
    assert CL == C * L
    F = LF // L
    H = wf1.shape[0]

    # Free row-major reshape (no transpose, no HBM round trip).
    x2 = x_ncl.reshape(B, C * L)

    # Batch tile: multiple of 8 sublanes; pad the tail tile with zeros.
    TB = _round_up(min(batch_tile, B), 8)
    G = pl.cdiv(B, TB)
    B_pad = G * TB
    if B_pad != B:
        x2 = jnp.pad(x2, ((0, B_pad - B), (0, 0)))

    flops = (2 * B_pad * (C * L) * (L * F)   # conv matmul
             + 2 * B_pad * F * H             # fc1
             + 2 * B_pad * H)                # fc2
    bytes_accessed = 4 * (x2.size + w_big.size + b1.size + wf1.size
                          + bf1.size + wf2.size + bf2.size + B_pad)

    out = pl.pallas_call(
        fraud_convnet_kernel,
        out_shape=jax.ShapeDtypeStruct((G, 1, TB), jnp.float32),
        grid=(G,),
        in_specs=[
            pl.BlockSpec((TB, C * L), lambda i: (i, 0)),       # streamed x tile
            pl.BlockSpec((C * L, L * F), lambda i: (0, 0)),    # weights: constant
            pl.BlockSpec((1, F), lambda i: (0, 0)),            # index_maps so they
            pl.BlockSpec((H, F), lambda i: (0, 0)),            # stay VMEM-resident
            pl.BlockSpec((H, 1), lambda i: (0, 0)),
            pl.BlockSpec((H, 1), lambda i: (0, 0)),
            pl.BlockSpec((1, 1), lambda i: (0, 0)),
        ],
        out_specs=pl.BlockSpec((1, 1, TB), lambda i: (i, 0, 0)),
        compiler_params=pltpu.CompilerParams(
            dimension_semantics=("parallel",)),
        cost_estimate=pl.CostEstimate(flops=int(flops),
                                      transcendentals=int(B_pad),
                                      bytes_accessed=int(bytes_accessed)),
    )(x2, w_big, b1, wf1, bf1, wf2, bf2)

    return out.reshape(B_pad, 1)[:B]


def reference_forward(x_ncl, torch_params):
    """Pure-JAX reference with the exact PyTorch semantics (for verification)."""
    w1_t, b1, wf1_t, bf1, wf2_t, bf2 = torch_params   # torch-native layouts
    F, C, K = w1_t.shape
    B, _, L = x_ncl.shape
    x_pad = jnp.pad(x_ncl, ((0, 0), (0, 0), (K - 1, 0)))          # ConstantPad1d((K-1,0),0)
    conv = sum(jnp.einsum("fc,bcl->bfl", w1_t[:, :, k], x_pad[:, :, k:k + L])
               for k in range(K)) + b1[None, :, None]             # (B, F, L)
    rep = jnp.max(conv, axis=-1)                                  # MaxPool1d(L) + flatten
    hidden = jnp.maximum(rep @ wf1_t.T + bf1[None, :], 0.0)       # (B, H)
    logit = hidden @ wf2_t.T + bf2[None, :]                       # (B, 1)
    return jax.nn.sigmoid(logit)


def init_params(key, num_features, filter_size, num_filters, hidden_size):
    """Deterministic init mimicking PyTorch default U(-1/sqrt(fan_in), +). Torch layouts."""
    C, K, F, H = num_features, filter_size, num_filters, hidden_size
    ks = jax.random.split(key, 6)

    bc = (1.0 / (C * K)) ** 0.5
    w1_t = jax.random.uniform(ks[0], (F, C, K), jnp.float32, -bc, bc)
    b1 = jax.random.uniform(ks[1], (F,), jnp.float32, -bc, bc)

    bf = (1.0 / F) ** 0.5
    wf1_t = jax.random.uniform(ks[2], (H, F), jnp.float32, -bf, bf)
    bf1 = jax.random.uniform(ks[3], (H,), jnp.float32, -bf, bf)

    bh = (1.0 / H) ** 0.5
    wf2_t = jax.random.uniform(ks[4], (1, H), jnp.float32, -bh, bh)
    bf2 = jax.random.uniform(ks[5], (1,), jnp.float32, -bh, bh)

    return (w1_t, b1, wf1_t, bf1, wf2_t, bf2)


def pack_params(torch_params, seq_len):
    """One-time weight re-layout for the kernel (off the forward path).

    Builds the block-Toeplitz conv matrix W_big (C*L, L*F) with
      W_big[c*L + t, l*F + f] = w1[f, c, t - l + K - 1]   if 0 <= t-l+K-1 < K
                              = 0                          otherwise,
    which is exactly causal ConstantPad1d((K-1, 0)) + Conv1d as one matmul on
    the row-major (B, C*L) view of x.
    """
    w1_t, b1, wf1_t, bf1, wf2_t, bf2 = torch_params
    F, C, K = w1_t.shape
    H = wf1_t.shape[0]
    L = seq_len

    w_big = jnp.zeros((C * L, L * F), jnp.float32)
    for l in range(L):
        for k in range(K):
            t = l + k - (K - 1)
            if t < 0:
                continue                       # causal zero-pad region
            w_big = w_big.at[t::L, l * F:(l + 1) * F].set(w1_t[:, :, k].T)

    return (w_big,
            b1.reshape(1, F),
            wf1_t,                 # (H, F), used as-is in the transposed FC tail
            bf1.reshape(H, 1),
            wf2_t.reshape(H, 1),
            bf2.reshape(1, 1))


if __name__ == "__main__":
    # Shapes consistent with FraudConvNet(num_features=4, seq_len=8, hidden_size=32,
    # conv1_params=(32, 2), conv2_params=None, max_pooling=True)
    B, C, L = 2, 4, 8
    F, K, H = 32, 2, 32

    key = jax.random.PRNGKey(0)
    kx, kp, kx2 = jax.random.split(key, 3)
    x = jax.random.normal(kx, (B, C, L), jnp.float32)          # NCL, like PyTorch
    torch_params = init_params(kp, C, K, F, H)
    packed = pack_params(torch_params, L)

    out = jax.block_until_ready(fraud_convnet_forward(x, packed))
    ref = jax.block_until_ready(reference_forward(x, torch_params))
    assert out.shape == (B, 1), out.shape
    assert jnp.allclose(out, ref, rtol=1e-5, atol=1e-5), (out, ref)

    # Second check: exercise the multi-tile grid path + tail padding.
    B2 = 300
    x_big = jax.random.normal(kx2, (B2, C, L), jnp.float32)
    out2 = jax.block_until_ready(fraud_convnet_forward(x_big, packed, batch_tile=128))
    ref2 = jax.block_until_ready(reference_forward(x_big, torch_params))
    assert out2.shape == (B2, 1), out2.shape
    assert jnp.allclose(out2, ref2, rtol=1e-5, atol=1e-5)

    print("KERNEL_OK")
</pallas_src>

<mosaic_0001>
module attributes {stable_mosaic.version = 11 : i64} {
  func.func @fraud_convnet_kernel(%arg0: i32, %arg1: memref<8x32xf32, #tpu.memory_space<vmem>>, %arg2: memref<32x256xf32, #tpu.memory_space<vmem>>, %arg3: memref<1x32xf32, #tpu.memory_space<vmem>>, %arg4: memref<32x32xf32, #tpu.memory_space<vmem>>, %arg5: memref<32x1xf32, #tpu.memory_space<vmem>>, %arg6: memref<32x1xf32, #tpu.memory_space<vmem>>, %arg7: memref<1x1xf32, #tpu.memory_space<vmem>>, %arg8: memref<1x1x8xf32, #tpu.memory_space<vmem>>) attributes {dimension_semantics = [#tpu.dimension_semantics<parallel>], iteration_bounds = array<i64: 1>, scalar_prefetch = 0 : i64, scratch_operands = 0 : i64, tpu.core_type = #tpu.core_type<tc>, window_params = [{transform_indices = @transform_0, window_bounds = array<i64: 8, 32>}, {pipeline_mode = #tpu.pipeline_mode<synchronous>, transform_indices = @transform_1, window_bounds = array<i64: 32, 256>}, {pipeline_mode = #tpu.pipeline_mode<synchronous>, transform_indices = @transform_2, window_bounds = array<i64: 1, 32>}, {pipeline_mode = #tpu.pipeline_mode<synchronous>, transform_indices = @transform_3, window_bounds = array<i64: 32, 32>}, {pipeline_mode = #tpu.pipeline_mode<synchronous>, transform_indices = @transform_4, window_bounds = array<i64: 32, 1>}, {pipeline_mode = #tpu.pipeline_mode<synchronous>, transform_indices = @transform_5, window_bounds = array<i64: 32, 1>}, {pipeline_mode = #tpu.pipeline_mode<synchronous>, transform_indices = @transform_6, window_bounds = array<i64: 1, 1>}, {transform_indices = @transform_7, window_bounds = array<i64: 1, 1, 8>}]} {
    %c0 = arith.constant 0 : index
    %c0_0 = arith.constant 0 : index
    %0 = vector.load %arg1[%c0, %c0_0] : memref<8x32xf32, #tpu.memory_space<vmem>>, vector<8x32xf32>
    %c0_1 = arith.constant 0 : index
    %c0_2 = arith.constant 0 : index
    %1 = vector.load %arg2[%c0_1, %c0_2] : memref<32x256xf32, #tpu.memory_space<vmem>>, vector<32x256xf32>
    %cst = arith.constant dense<0.000000e+00> : vector<8x256xf32>
    %2 = tpu.matmul %0, %1, %cst {dimension_numbers = #tpu.dot_dimension_numbers<[1], [0], [0], [1], [0, 0, 1, 1], [], []>} : vector<8x32xf32>, vector<32x256xf32>, vector<8x256xf32> -> vector<8x256xf32>
    %3 = vector.extract_strided_slice %2 {offsets = [0, 0], sizes = [8, 32], strides = [1, 1]} : vector<8x256xf32> to vector<8x32xf32>
    %4 = vector.extract_strided_slice %2 {offsets = [0, 32], sizes = [8, 32], strides = [1, 1]} : vector<8x256xf32> to vector<8x32xf32>
    %5 = arith.maximumf %3, %4 : vector<8x32xf32>
    %6 = vector.extract_strided_slice %2 {offsets = [0, 64], sizes = [8, 32], strides = [1, 1]} : vector<8x256xf32> to vector<8x32xf32>
    %7 = arith.maximumf %5, %6 : vector<8x32xf32>
    %8 = vector.extract_strided_slice %2 {offsets = [0, 96], sizes = [8, 32], strides = [1, 1]} : vector<8x256xf32> to vector<8x32xf32>
    %9 = arith.maximumf %7, %8 : vector<8x32xf32>
    %10 = vector.extract_strided_slice %2 {offsets = [0, 128], sizes = [8, 32], strides = [1, 1]} : vector<8x256xf32> to vector<8x32xf32>
    %11 = arith.maximumf %9, %10 : vector<8x32xf32>
    %12 = vector.extract_strided_slice %2 {offsets = [0, 160], sizes = [8, 32], strides = [1, 1]} : vector<8x256xf32> to vector<8x32xf32>
    %13 = arith.maximumf %11, %12 : vector<8x32xf32>
    %14 = vector.extract_strided_slice %2 {offsets = [0, 192], sizes = [8, 32], strides = [1, 1]} : vector<8x256xf32> to vector<8x32xf32>
    %15 = arith.maximumf %13, %14 : vector<8x32xf32>
    %16 = vector.extract_strided_slice %2 {offsets = [0, 224], sizes = [8, 32], strides = [1, 1]} : vector<8x256xf32> to vector<8x32xf32>
    %17 = arith.maximumf %15, %16 : vector<8x32xf32>
    %c0_3 = arith.constant 0 : index
    %c0_4 = arith.constant 0 : index
    %18 = vector.load %arg3[%c0_3, %c0_4] : memref<1x32xf32, #tpu.memory_space<vmem>>, vector<1x32xf32>
    %19 = vector.broadcast %18 : vector<1x32xf32> to vector<8x32xf32>
    %20 = arith.addf %17, %19 : vector<8x32xf32>
    %21 = tpu.transpose %20, [1, 0] : vector<8x32xf32> -> vector<32x8xf32>
    %c0_5 = arith.constant 0 : index
    %c0_6 = arith.constant 0 : index
    %22 = vector.load %arg4[%c0_5, %c0_6] : memref<32x32xf32, #tpu.memory_space<vmem>>, vector<32x32xf32>
    %cst_7 = arith.constant dense<0.000000e+00> : vector<32x8xf32>
    %23 = tpu.matmul %22, %21, %cst_7 {dimension_numbers = #tpu.dot_dimension_numbers<[1], [0], [0], [1], [0, 0, 1, 1], [], []>} : vector<32x32xf32>, vector<32x8xf32>, vector<32x8xf32> -> vector<32x8xf32>
    %c0_8 = arith.constant 0 : index
    %c0_9 = arith.constant 0 : index
    %24 = vector.load %arg5[%c0_8, %c0_9] : memref<32x1xf32, #tpu.memory_space<vmem>>, vector<32x1xf32>
    %25 = vector.broadcast %24 : vector<32x1xf32> to vector<32x8xf32>
    %26 = arith.addf %23, %25 : vector<32x8xf32>
    %cst_10 = arith.constant 0.000000e+00 : f32
    %27 = vector.broadcast %cst_10 : f32 to vector<32x8xf32>
    %28 = arith.maximumf %26, %27 : vector<32x8xf32>
    %c0_11 = arith.constant 0 : index
    %c0_12 = arith.constant 0 : index
    %29 = vector.load %arg6[%c0_11, %c0_12] : memref<32x1xf32, #tpu.memory_space<vmem>>, vector<32x1xf32>
    %30 = vector.broadcast %29 : vector<32x1xf32> to vector<32x8xf32>
    %31 = arith.mulf %28, %30 : vector<32x8xf32>
    %cst_13 = arith.constant dense<0.000000e+00> : vector<8xf32>
    %32 = vector.multi_reduction <add>, %31, %cst_13 [0] : vector<32x8xf32> to vector<8xf32>
    %33 = vector.shape_cast %32 : vector<8xf32> to vector<1x8xf32>
    %c0_14 = arith.constant 0 : index
    %c0_15 = arith.constant 0 : index
    %34 = vector.load %arg7[%c0_14, %c0_15] : memref<1x1xf32, #tpu.memory_space<vmem>>, vector<1x1xf32>
    %35 = vector.broadcast %34 : vector<1x1xf32> to vector<1x8xf32>
    %36 = arith.addf %33, %35 : vector<1x8xf32>
    %cst_16 = arith.constant 5.000000e-01 : f32
    %37 = vector.broadcast %cst_16 : f32 to vector<1x8xf32>
    %38 = arith.mulf %37, %36 : vector<1x8xf32>
    %39 = math.tanh %38 : vector<1x8xf32>
    %cst_17 = arith.constant 1.000000e+00 : f32
    %40 = vector.broadcast %cst_17 : f32 to vector<1x8xf32>
    %41 = arith.addf %39, %40 : vector<1x8xf32>
    %cst_18 = arith.constant 5.000000e-01 : f32
    %42 = vector.broadcast %cst_18 : f32 to vector<1x8xf32>
    %43 = arith.mulf %42, %41 : vector<1x8xf32>
    %c0_19 = arith.constant 0 : index
    %c0_20 = arith.constant 0 : index
    %c0_21 = arith.constant 0 : index
    %44 = vector.load %arg8[%c0_19, %c0_20, %c0_21] : memref<1x1x8xf32, #tpu.memory_space<vmem>>, vector<1x1x8xf32>
    %45 = vector.shape_cast %44 : vector<1x1x8xf32> to vector<1x8xf32>
    %46 = vector.shape_cast %43 : vector<1x8xf32> to vector<1x1x8xf32>
    tpu.vector_store %arg8[%c0_19, %c0_20, %c0_21], %46 {strides = array<i32>} : memref<1x1x8xf32, #tpu.memory_space<vmem>>, vector<1x1x8xf32>,
    return
  }
  func.func @transform_0(%arg0: i32) -> (i32, i32) {
    %c0_i32 = arith.constant 0 : i32
    %c0_i32_0 = arith.constant 0 : i32
    return %arg0, %c0_i32 : i32, i32
  }
  func.func @transform_1(%arg0: i32) -> (i32, i32) {
    %c0_i32 = arith.constant 0 : i32
    %c0_i32_0 = arith.constant 0 : i32
    %c0_i32_1 = arith.constant 0 : i32
    return %c0_i32, %c0_i32_0 : i32, i32
  }
  func.func @transform_2(%arg0: i32) -> (i32, i32) {
    %c0_i32 = arith.constant 0 : i32
    %c0_i32_0 = arith.constant 0 : i32
    %c0_i32_1 = arith.constant 0 : i32
    return %c0_i32, %c0_i32_0 : i32, i32
  }
  func.func @transform_3(%arg0: i32) -> (i32, i32) {
    %c0_i32 = arith.constant 0 : i32
    %c0_i32_0 = arith.constant 0 : i32
    %c0_i32_1 = arith.constant 0 : i32
    return %c0_i32, %c0_i32_0 : i32, i32
  }
  func.func @transform_4(%arg0: i32) -> (i32, i32) {
    %c0_i32 = arith.constant 0 : i32
    %c0_i32_0 = arith.constant 0 : i32
    %c0_i32_1 = arith.constant 0 : i32
    return %c0_i32, %c0_i32_0 : i32, i32
  }
  func.func @transform_5(%arg0: i32) -> (i32, i32) {
    %c0_i32 = arith.constant 0 : i32
    %c0_i32_0 = arith.constant 0 : i32
    %c0_i32_1 = arith.constant 0 : i32
    return %c0_i32, %c0_i32_0 : i32, i32
  }
  func.func @transform_6(%arg0: i32) -> (i32, i32) {
    %c0_i32 = arith.constant 0 : i32
    %c0_i32_0 = arith.constant 0 : i32
    %c0_i32_1 = arith.constant 0 : i32
    return %c0_i32, %c0_i32_0 : i32, i32
  }
  func.func @transform_7(%arg0: i32) -> (i32, i32, i32) {
    %c0_i32 = arith.constant 0 : i32
    %c0_i32_0 = arith.constant 0 : i32
    %c0_i32_1 = arith.constant 0 : i32
    return %arg0, %c0_i32, %c0_i32_0 : i32, i32, i32
  }
}

</mosaic_0001>

<llo_original>
// kernel: tpu_custom_call.1
$region0: #{tpu_custom_call.1}
  #allocation0 [shape = 'u32[]', space=smem, size = 0x4, offset = 0x4, fixed_abs, tag = 'smem constant byte address 0x4 - core index']
  #allocation1 [shape = 'u32[72,128]{1,0:T(1,128)}', space=vmem, size = 0x9000, scoped, tag = 'internal scratch']
  #allocation2 [shape = 'f32[1,1]{1,0:T(1,128)S(1)}', space=vmem, size = 0x200, scoped, tag = 'scoped memory for tpu_custom_call.1']
  %s0 = inlined_call_operand.hbm [shape: f32[8,32], index: 0, kind: input, shape index: {}]
  %s1 = inlined_call_operand.vmem [shape: f32[32,256], index: 1, kind: input, shape index: {}]
  %s2 = inlined_call_operand.vmem [shape: f32[1,32], index: 2, kind: input, shape index: {}]
  %s3 = inlined_call_operand.hbm [shape: f32[32,32], index: 3, kind: input, shape index: {}]
  %s4 = inlined_call_operand.vmem [shape: f32[32,1], index: 4, kind: input, shape index: {}]
  %s5 = inlined_call_operand.vmem [shape: f32[32,1], index: 5, kind: input, shape index: {}]
  %s6 = inlined_call_operand.<no memory space> [shape: f32[1,1], index: 6, kind: input, shape index: {}]
  %s7 = inlined_call_operand.hbm [shape: f32[1,1,8], index: 7, kind: output, shape index: {}]
  %s8 = sld [smem:[#allocation0]]
  $region46: #{tpu_custom_call.1} parent=0
    _
  %s10 = ssub.s32 1, %s8
  %s11 = scalar_select 0, %s10, %s8
  %v12 = vstv %s6
  %13 = vst [vmem:[#allocation2] sm:$0x1] %v12
  $region1: #{tpu_custom_call.1} parent=0
    #allocation3 [shape = 'u8[4096]{0}', space=vmem, size = 0x1000, scoped, tag = 'input window, operand 0, single buffered']
    #allocation4 [shape = 's32[1]{0}', space=sflag, size = 0x4, scoped, tag = 'scoped memory for tpu_custom_call.1']
    #allocation5 [shape = 's32[1]{0}', space=sflag, size = 0x4, scoped, tag = 'scoped memory for tpu_custom_call.1']
    #allocation6 [shape = 'u8[16384]{0}', space=vmem, size = 0x4000, scoped, tag = 'input window, operand 3, single buffered']
    #allocation7 [shape = 's32[1]{0}', space=sflag, size = 0x4, scoped, tag = 'scoped memory for tpu_custom_call.1']
    #allocation8 [shape = 'u8[512]{0}', space=vmem, size = 0x400, scoped, tag = 'output window, operand 0, single buffered']
    %14 = vsyncpa [#allocation4], 0
    %15 = vsyncpa [#allocation7], 0
    %16 = vsyncpa [#allocation5], 0
    // Predicated region
    $region2: #{tpu_custom_call.1} parent=1 // pred_check
      _
    $region3: #{tpu_custom_call.1} parent=1 // pred_check_branch
      %18 = sbr.rel (0) target = $region5
    $region4: #{tpu_custom_call.1} parent=1 // pred_region
      %20 = vsyncadd [#allocation4], 0
      %s22 = sshll.u32 %s0, 4
      %s23 = int_to_ptr.hbm [resolvable:$true] %s22
      %s24 = sshll.u32 [#allocation3], 4
      %s25 = int_to_ptr.vmem [resolvable:$true] %s24
      %27 = dma.hbm_to_vmem [thread:$0]  %s23, 128, %s25, [#allocation4]
    $region5: #{tpu_custom_call.1} parent=1 // pred_fallthru
      _
    // Predicated region
    $region6: #{tpu_custom_call.1} parent=1 // pred_check
      _
    $region7: #{tpu_custom_call.1} parent=1 // pred_check_branch
      %29 = sbr.rel (0) target = $region9
    $region8: #{tpu_custom_call.1} parent=1 // pred_region
      _
    $region9: #{tpu_custom_call.1} parent=1 // pred_fallthru
      _
    // Predicated region
    $region10: #{tpu_custom_call.1} parent=1 // pred_check
      _
    $region11: #{tpu_custom_call.1} parent=1 // pred_check_branch
      %31 = sbr.rel (0) target = $region13
    $region12: #{tpu_custom_call.1} parent=1 // pred_region
      _
    $region13: #{tpu_custom_call.1} parent=1 // pred_fallthru
      _
    // Predicated region
    $region14: #{tpu_custom_call.1} parent=1 // pred_check
      _
    $region15: #{tpu_custom_call.1} parent=1 // pred_check_branch
      %33 = sbr.rel (0) target = $region17
    $region16: #{tpu_custom_call.1} parent=1 // pred_region
      %35 = vsyncadd [#allocation7], 0
      %s36 = sshll.u32 %s3, 4
      %s37 = int_to_ptr.hbm [resolvable:$true] %s36
      %s38 = sshll.u32 [#allocation6], 4
      %s39 = int_to_ptr.vmem [resolvable:$true] %s38
      %44 = dma.hbm_to_vmem [thread:$0]  %s37, 512, %s39, [#allocation7], 128, 128, 8
    $region17: #{tpu_custom_call.1} parent=1 // pred_fallthru
      _
    // Predicated region
    $region18: #{tpu_custom_call.1} parent=1 // pred_check
      _
    $region19: #{tpu_custom_call.1} parent=1 // pred_check_branch
      %46 = sbr.rel (0) target = $region21
    $region20: #{tpu_custom_call.1} parent=1 // pred_region
      _
    $region21: #{tpu_custom_call.1} parent=1 // pred_fallthru
      _
    // Predicated region
    $region22: #{tpu_custom_call.1} parent=1 // pred_check
      _
    $region23: #{tpu_custom_call.1} parent=1 // pred_check_branch
      %48 = sbr.rel (0) target = $region25
    $region24: #{tpu_custom_call.1} parent=1 // pred_region
      _
    $region25: #{tpu_custom_call.1} parent=1 // pred_fallthru
      _
    // Predicated region
    $region26: #{tpu_custom_call.1} parent=1 // pred_check
      _
    $region27: #{tpu_custom_call.1} parent=1 // pred_check_branch
      %50 = sbr.rel (0) target = $region29
    $region28: #{tpu_custom_call.1} parent=1 // pred_region
      _
    $region29: #{tpu_custom_call.1} parent=1 // pred_fallthru
      _
    // Predicated region
    $region30: #{tpu_custom_call.1} parent=1 // pred_check
      _
    $region31: #{tpu_custom_call.1} parent=1 // pred_check_branch
      %52 = sbr.rel (0) target = $region33
    $region32: #{tpu_custom_call.1} parent=1 // pred_region
      %54 = dma.done [#allocation4], 128
    $region33: #{tpu_custom_call.1} parent=1 // pred_fallthru
      _
    // Predicated region
    $region34: #{tpu_custom_call.1} parent=1 // pred_check
      _
    $region35: #{tpu_custom_call.1} parent=1 // pred_check_branch
      %56 = sbr.rel (0) target = $region37
    $region36: #{tpu_custom_call.1} parent=1 // pred_region
      %58 = dma.done [#allocation7], 512
    $region37: #{tpu_custom_call.1} parent=1 // pred_fallthru
      _
    %v59 = vld [vmem:[#allocation3] sm:$0xff]
    %v60 = vld [vmem:[%s1] sm:$0xff]
    %v61 = vld [vmem:[%s1 + $0x8] sm:$0xff]
    %v62 = vld [vmem:[%s1 + $0x10] sm:$0xff]
    %v63 = vld [vmem:[%s1 + $0x18] sm:$0xff]
    %v64 = vld [vmem:[%s1 + $0x20] sm:$0xff]
    %v65 = vld [vmem:[%s1 + $0x28] sm:$0xff]
    %v66 = vld [vmem:[%s1 + $0x30] sm:$0xff]
    %v67 = vld [vmem:[%s1 + $0x38] sm:$0xff]
    %vm68 = vcmask 261120
    %v70 = vsel %vm68, %v59, 0
    %72 = vmatpush.msra.mxu0 0.0
    %73 = vmatpush.msra.mxu0 0.0
    %74 = vmatpush.msra.mxu0 0.0
    %75 = vmatpush.msra.mxu0 0.0
    %76 = vmatpush.msra.mxu0 0.0
    %77 = vmatpush.msra.mxu0 0.0
    %78 = vmatpush.msra.mxu0 0.0
    %79 = vmatpush.msra.mxu0 0.0
    %80 = vmatpush.msra.mxu0 0.0
    %81 = vmatpush.msra.mxu0 0.0
    %82 = vmatpush.msra.mxu0 0.0
    %83 = vmatpush.msra.mxu0 0.0
    %84 = vmatpush.msra.mxu0 %v66
    %85 = vmatpush.msra.mxu0 %v64
    %86 = vmatpush.msra.mxu0 %v62
    %87 = vmatpush.msra.mxu0 %v60
    %88 = vmatmul.f32.gmra.mxu0 %v70
    %v89 = vpop.f32.mrf.mxu0
    %v90 = vadd.f32 0.0, %v89
    %91 = vdwg.mxu0
    %92 = vmatpush.msra.mxu0 0.0
    %93 = vmatpush.msra.mxu0 0.0
    %94 = vmatpush.msra.mxu0 0.0
    %95 = vmatpush.msra.mxu0 0.0
    %96 = vmatpush.msra.mxu0 0.0
    %97 = vmatpush.msra.mxu0 0.0
    %98 = vmatpush.msra.mxu0 0.0
    %99 = vmatpush.msra.mxu0 0.0
    %100 = vmatpush.msra.mxu0 0.0
    %101 = vmatpush.msra.mxu0 0.0
    %102 = vmatpush.msra.mxu0 0.0
    %103 = vmatpush.msra.mxu0 0.0
    %104 = vmatpush.msra.mxu0 %v67
    %105 = vmatpush.msra.mxu0 %v65
    %106 = vmatpush.msra.mxu0 %v63
    %107 = vmatpush.msra.mxu0 %v61
    %108 = vmatmul.f32.gmra.mxu0 %v70
    %v109 = vpop.f32.mrf.mxu0
    %v110 = vadd.f32 0.0, %v109
    %111 = vdwg.mxu0
    %113 = vrot.lane.b32.xlu0 %v90, 96
    %v114 = vpop.permute.xlu0 %113
    %v116 = vmax.f32 %v90, %v114
    %117 = vrot.lane.b32.xlu0 %v90, 64
    %v118 = vpop.permute.xlu0 %117
    %v120 = vmax.f32 %v116, %v118
    %121 = vrot.lane.b32.xlu0 %v90, 32
    %v122 = vpop.permute.xlu0 %121
    %v124 = vmax.f32 %v120, %v122
    %v125 = vmax.f32 %v124, %v110
    %127 = vrot.lane.b32.xlu0 %v110, 96
    %v128 = vpop.permute.xlu0 %127
    %v130 = vmax.f32 %v125, %v128
    %131 = vrot.lane.b32.xlu0 %v110, 64
    %v132 = vpop.permute.xlu0 %131
    %v134 = vmax.f32 %v130, %v132
    %135 = vrot.lane.b32.xlu0 %v110, 32
    %v136 = vpop.permute.xlu0 %135
    %v138 = vmax.f32 %v134, %v136
    %v139 = vld [vmem:[%s2] sm:$0x1]
    %v141 = vperm.slane %v139, 0
    %v143 = vadd.f32 %v138, %v141
    %v144 = vld [vmem:[#allocation6] sm:$0xff]
    %v145 = vld [vmem:[#allocation6 + $0x8] sm:$0xff]
    %v146 = vld [vmem:[#allocation6 + $0x10] sm:$0xff]
    %v147 = vld [vmem:[#allocation6 + $0x18] sm:$0xff]
    %v148 = vld [vmem:[%s4] sm:$0xff]
    %v149 = vld [vmem:[%s4 + $0x8] sm:$0xff]
    %v150 = vld [vmem:[%s4 + $0x10] sm:$0xff]
    %v151 = vld [vmem:[%s4 + $0x18] sm:$0xff]
    %153 = vset.pattern.permute.xlu0 0
    %154 = vperm.xlu0 %153, %v148
    %v155 = vpop.permute.xlu0 %154
    %158 = vset.pattern.permute.xlu0 0
    %159 = vperm.xlu0 %158, %v149
    %v160 = vpop.permute.xlu0 %159
    %163 = vset.pattern.permute.xlu0 0
    %164 = vperm.xlu0 %163, %v150
    %v165 = vpop.permute.xlu0 %164
    %168 = vset.pattern.permute.xlu0 0
    %169 = vperm.xlu0 %168, %v151
    %v170 = vpop.permute.xlu0 %169
    %v173 = vsel %vm68, %v144, 0
    %v176 = vsel %vm68, %v145, 0
    %v179 = vsel %vm68, %v146, 0
    %v182 = vsel %vm68, %v147, 0
    %v185 = vsel %vm68, %v143, 0
    %187 = vmatpush.xpose.msra.mxu0 0.0
    %188 = vmatpush.xpose.msra.mxu0 0.0
    %189 = vmatpush.xpose.msra.mxu0 0.0
    %190 = vmatpush.xpose.msra.mxu0 0.0
    %191 = vmatpush.xpose.msra.mxu0 0.0
    %192 = vmatpush.xpose.msra.mxu0 0.0
    %193 = vmatpush.xpose.msra.mxu0 0.0
    %194 = vmatpush.xpose.msra.mxu0 0.0
    %195 = vmatpush.xpose.msra.mxu0 0.0
    %196 = vmatpush.xpose.msra.mxu0 0.0
    %197 = vmatpush.xpose.msra.mxu0 0.0
    %198 = vmatpush.xpose.msra.mxu0 0.0
    %199 = vmatpush.xpose.msra.mxu0 0.0
    %200 = vmatpush.xpose.msra.mxu0 0.0
    %201 = vmatpush.xpose.msra.mxu0 0.0
    %202 = vmatpush.xpose.msra.mxu0 %v185
    %203 = vmatmul.f32.gmra.mxu0 %v173
    %v204 = vpop.f32.mrf.mxu0
    %v205 = vadd.f32 %v155, %v204
    %206 = vmatmul.f32.gmra.mxu0 %v176
    %v207 = vpop.f32.mrf.mxu0
    %v208 = vadd.f32 %v160, %v207
    %209 = vmatmul.f32.gmra.mxu0 %v179
    %v210 = vpop.f32.mrf.mxu0
    %v211 = vadd.f32 %v165, %v210
    %212 = vmatmul.f32.gmra.mxu0 %v182
    %v213 = vpop.f32.mrf.mxu0
    %v214 = vadd.f32 %v170, %v213
    %215 = vdwg.mxu0
    %v216 = vmax.f32 %v205, 0.0
    %v217 = vmax.f32 %v208, 0.0
    %v218 = vmax.f32 %v211, 0.0
    %v219 = vmax.f32 %v214, 0.0
    %v220 = vld [vmem:[%s5] sm:$0xff]
    %v221 = vld [vmem:[%s5 + $0x8] sm:$0xff]
    %v222 = vld [vmem:[%s5 + $0x10] sm:$0xff]
    %v223 = vld [vmem:[%s5 + $0x18] sm:$0xff]
    %225 = vset.pattern.permute.xlu0 0
    %226 = vperm.xlu0 %225, %v220
    %v227 = vpop.permute.xlu0 %226
    %230 = vset.pattern.permute.xlu0 0
    %231 = vperm.xlu0 %230, %v221
    %v232 = vpop.permute.xlu0 %231
    %235 = vset.pattern.permute.xlu0 0
    %236 = vperm.xlu0 %235, %v222
    %v237 = vpop.permute.xlu0 %236
    %240 = vset.pattern.permute.xlu0 0
    %241 = vperm.xlu0 %240, %v223
    %v242 = vpop.permute.xlu0 %241
    %v244 = vmul.f32 %v216, %v227
    %v245 = vmul.f32 %v217, %v232
    %v246 = vmul.f32 %v218, %v237
    %v247 = vmul.f32 %v219, %v242
    %vm248 = vcmask 64512
    %v249 = vsel %vm248, %v244, 0.0
    %v250 = vsel %vm248, %v245, 0.0
    %v251 = vadd.f32 %v249, %v250
    %v252 = vsel %vm248, %v246, 0.0
    %v253 = vadd.f32 %v251, %v252
    %v254 = vsel %vm248, %v247, 0.0
    %v255 = vadd.f32 %v253, %v254
    %v256 = vrot.slane %v255, 4
    %v257 = vadd.f32 %v255, %v256
    %v258 = vrot.slane %v257, 2
    %v259 = vadd.f32 %v257, %v258
    %v260 = vrot.slane %v259, 1
    %v261 = vadd.f32 %v259, %v260
    %v262 = vld [vmem:[#allocation2] sm:$0x1]
    %264 = vset.pattern.permute.xlu0 0
    %265 = vperm.xlu0 %264, %v262
    %v266 = vpop.permute.xlu0 %265
    %v268 = vperm.slane %v266, 0
    %v269 = vadd.f32 %v261, %v268
    %v270 = vmul.f32 %v269, 0.5
    %v271 = vtanh.pop %v270
    %v272 = vadd.f32 %v271, 1.0
    %v273 = vmul.f32 %v272, 0.5
    %vm274 = vcmask 57344
    %275 = vst.msk [vmem:[#allocation8] sm:$0x1] %vm274, %v273
    // Predicated region
    $region38: #{tpu_custom_call.1} parent=1 // pred_check
      _
    $region39: #{tpu_custom_call.1} parent=1 // pred_check_branch
      %277 = sbr.rel (0) target = $region41
    $region40: #{tpu_custom_call.1} parent=1 // pred_region
      %279 = vsyncadd [#allocation5], 0
      %s281 = sshll.u32 [#allocation8], 4
      %s282 = int_to_ptr.vmem [resolvable:$true] %s281
      %s283 = sshll.u32 %s7, 4
      %s284 = int_to_ptr.hbm [resolvable:$true] %s283
      %286 = dma.vmem_to_hbm [thread:$0]  %s282, 16, %s284, [#allocation5]
    $region41: #{tpu_custom_call.1} parent=1 // pred_fallthru
      _
    // Predicated region
    $region42: #{tpu_custom_call.1} parent=1 // pred_check
      _
    $region43: #{tpu_custom_call.1} parent=1 // pred_check_branch
      %288 = sbr.rel (0) target = $region45
    $region44: #{tpu_custom_call.1} parent=1 // pred_region
      %290 = dma.done [#allocation5], 16
    $region45: #{tpu_custom_call.1} parent=1 // pred_fallthru
      _
    %291 = vsyncpa [#allocation4], 1
    %292 = vsyncpa [#allocation7], 1
    %293 = vsyncpa [#allocation5], 1

</llo_original>
